<compile_context>
chip_gen: v7x
topology: tpu7x:2x2x1
jax: 0.10.0
libtpu: 0.0.40
codegen_flags: <defaults>
</compile_context>

<pallas_src>
import jax
import jax.numpy as jnp
from jax.experimental import pallas as pl
from jax.experimental.pallas import tpu as pltpu

# --- problem sizes (small, consistent with the module) -----------------------
NUM_EMB = 100        # num_embeddings (synthetic vocab)
E = 32               # embedding_dim
H = 32               # hidden_size (conv out channels)
OUT = 1              # output_size
K = 3                # conv kernel_size
L = 20               # sequence length (MaxPool1d width hardcoded to 20-K+1)
L_OUT = L - K + 1    # conv output length = 18 (maxpool reduces it to 1)
B = 2                # batch

LANE = 128           # TPU lane width
V_PAD = 128          # vocab padded to one lane tile
RPB = 24             # rows per batch: L padded up to a multiple of 8 sublanes
R = B * RPB          # total gather rows = 48


def cnn_kernel(ids_ref, t_ref, params_ref, o_ref):
    # ids_ref:    (R, K*128) int32. ids3[r, dk*128 + lane] = token id x[b, t+dk]
    #             replicated across the 128 lanes of tap-block dk (-1 = padding).
    # t_ref:      (K*128, 128) f32 fused (embedding @ conv-tap) table, rows
    #             grouped by tap, lanes padded H -> 128 with zeros.
    # params_ref: (8, 128) f32 packed params: row0 = conv bias, row1 = linear
    #             weight, [2,0] = linear bias (lane-padded with zeros).
    # o_ref:      (B, OUT) f32

    # Block one-hot LHS: onehot[r, dk*128 + v] = (v == ids3[r, dk]).
    # Pure lane-local VPU compare -- no cross-lane/sublane movement.
    vocab_lane = jax.lax.broadcasted_iota(jnp.int32, (R, K * LANE), 1) % V_PAD
    onehot = (vocab_lane == ids_ref[...]).astype(jnp.float32)          # (R, 384)

    # One MXU matmul fuses embedding gather + all K conv taps + tap summation.
    # Result is already the (pre-bias) conv output, lane-dense (R, 128).
    conv = jnp.dot(onehot, t_ref[...],
                   preferred_element_type=jnp.float32)                  # (R, 128)

    # Conv bias + ReLU (padded lanes >= H stay exactly 0).
    conv = jnp.maximum(conv + params_ref[0:1, :], 0.0)

    # MaxPool1d over the valid L_OUT time steps of each batch block.
    # Batch blocks are RPB=24 rows (8-sublane aligned) so the reshape is free;
    # rows t >= L_OUT hold partial/padded sums and are simply not reduced over.
    pooled = jnp.max(conv.reshape(B, RPB, LANE)[:, :L_OUT, :], axis=1)  # (B, 128)

    # Linear (H -> OUT=1) on the VPU/XLU: multiply by the lane-padded weight
    # row, reduce over lanes, add bias.
    wlin = params_ref[1:2, :]                                           # (1, 128)
    blin = params_ref[2:3, 0:1]                                         # (1, 1)
    out = jnp.sum(pooled * wlin, axis=-1, keepdims=True) + blin         # (B, 1)
    o_ref[...] = out.astype(o_ref.dtype)


def cnn_forward(token_ids, emb_table, conv_w, conv_b, lin_w, lin_b):
    """token_ids: (B, L) int. Returns (B, OUT) float32."""
    emb_f32 = emb_table.astype(jnp.float32)                              # (V, E)

    # --- fused weight table: T3[dk*V_PAD + v, h] = (emb @ W_tap_dk)[v, h] ----
    # torch Conv1d weight (H, E, K) -> taps (K, E, H)
    w_taps = jnp.transpose(conv_w, (2, 1, 0)).astype(jnp.float32)        # (K, E, H)
    t_blocks = jnp.einsum("ve,keh->kvh", emb_f32, w_taps)                # (K, V, H)
    t_blocks = jnp.pad(t_blocks,
                       ((0, 0), (0, V_PAD - NUM_EMB), (0, LANE - H)))    # (K, 128, 128)
    t3 = t_blocks.reshape(K * V_PAD, LANE)                               # (384, 128)

    # --- gather indices: per-batch rows padded L=20 -> RPB=24 (sublane align),
    #     shifted copies for the K conv taps, each replicated over its
    #     128-lane block (lane-dense, one contiguous DMA).
    ids = token_ids.astype(jnp.int32)                                    # (B, L)
    ids_pad = jnp.full((B, RPB + K - 1), -1, jnp.int32).at[:, :L].set(ids)
    shifted = jnp.stack([ids_pad[:, dk:dk + RPB] for dk in range(K)],
                        axis=-1)                                         # (B, RPB, K)
    ids3 = jnp.broadcast_to(shifted.reshape(R, K, 1),
                            (R, K, LANE)).reshape(R, K * LANE)           # (48, 384)

    # --- tiny params packed into a single (8,128) tile: one DMA, not three.
    params = jnp.zeros((8, LANE), jnp.float32)
    params = params.at[0, :H].set(conv_b.astype(jnp.float32))
    params = params.at[1, :H].set(lin_w.reshape(H).astype(jnp.float32))
    params = params.at[2, 0].set(lin_b.reshape(())[...].astype(jnp.float32))

    vmem = pl.BlockSpec(memory_space=pltpu.MemorySpace.VMEM)
    out = pl.pallas_call(
        cnn_kernel,
        out_shape=jax.ShapeDtypeStruct((B, OUT), jnp.float32),
        in_specs=[vmem, vmem, vmem],
        out_specs=vmem,
    )(ids3, t3, params)
    return out


def cnn_reference(token_ids, emb_table, conv_w, conv_b, lin_w, lin_b):
    """Pure-JAX reference mirroring the PyTorch forward (for verification)."""
    x = emb_table[token_ids].astype(jnp.float32)                # (B, L, E)
    x_ncw = jnp.transpose(x, (0, 2, 1))                         # (B, E, L)
    cols = jnp.stack([x_ncw[:, :, t:t + K] for t in range(L_OUT)], axis=2)  # (B,E,L_OUT,K)
    conv = jnp.einsum("belk,hek->bhl", cols, conv_w) + conv_b[None, :, None]
    conv = jnp.maximum(conv, 0.0)
    pooled = jnp.max(conv, axis=2)                              # (B, H)
    return pooled @ lin_w.T + lin_b                             # (B, OUT)


if __name__ == "__main__":
    key = jax.random.PRNGKey(0)
    k_ids, k_emb, k_cw, k_cb, k_lw, k_lb = jax.random.split(key, 6)

    token_ids = jax.random.randint(k_ids, (B, L), 0, NUM_EMB, dtype=jnp.int32)
    emb_table = jax.random.normal(k_emb, (NUM_EMB, E), dtype=jnp.float32) * 0.1
    conv_w = jax.random.normal(k_cw, (H, E, K), dtype=jnp.float32) * 0.05   # torch Conv1d: (out, in, k)
    conv_b = jax.random.normal(k_cb, (H,), dtype=jnp.float32) * 0.05
    lin_w = jax.random.normal(k_lw, (OUT, H), dtype=jnp.float32) * 0.05     # torch Linear: (out, in)
    lin_b = jax.random.normal(k_lb, (OUT,), dtype=jnp.float32) * 0.05

    out = cnn_forward(token_ids, emb_table, conv_w, conv_b, lin_w, lin_b)
    out = jax.block_until_ready(out)

    ref = cnn_reference(token_ids, emb_table, conv_w, conv_b, lin_w, lin_b)
    assert out.shape == (B, OUT)
    assert jnp.allclose(out, ref, atol=1e-4, rtol=1e-4), (out, ref)

    print("KERNEL_OK")
</pallas_src>

<mosaic_0001>
module attributes {stable_mosaic.version = 11 : i64} {
  func.func @cnn_kernel(%arg0: memref<48x384xi32, #tpu.memory_space<vmem>>, %arg1: memref<384x128xf32, #tpu.memory_space<vmem>>, %arg2: memref<8x128xf32, #tpu.memory_space<vmem>>, %arg3: memref<2x1xf32, #tpu.memory_space<vmem>>) attributes {dimension_semantics = [], scalar_prefetch = 0 : i64, scratch_operands = 0 : i64, tpu.core_type = #tpu.core_type<tc>} {
    %0 = tpu.iota {dimensions = array<i32: 1>} : vector<48x384xi32>
    %c128_i32 = arith.constant 128 : i32
    %c0_i32 = arith.constant 0 : i32
    %1 = arith.cmpi eq, %c128_i32, %c0_i32 : i32
    %c1_i32 = arith.constant 1 : i32
    %2 = arith.select %1, %c1_i32, %c128_i32 : i32
    %3 = vector.broadcast %2 : i32 to vector<48x384xi32>
    %4 = arith.remsi %0, %3 : vector<48x384xi32>
    %c0_i32_0 = arith.constant 0 : i32
    %5 = vector.broadcast %c0_i32_0 : i32 to vector<48x384xi32>
    %6 = arith.cmpi ne, %4, %5 : vector<48x384xi32>
    %c0_i32_1 = arith.constant 0 : i32
    %7 = vector.broadcast %c0_i32_1 : i32 to vector<48x384xi32>
    %8 = arith.cmpi slt, %4, %7 : vector<48x384xi32>
    %c0_i32_2 = arith.constant 0 : i32
    %9 = arith.cmpi slt, %2, %c0_i32_2 : i32
    %10 = vector.broadcast %9 : i1 to vector<48x384xi1>
    %11 = vector.broadcast %10 : vector<48x384xi1> to vector<48x384xi1>
    %12 = arith.xori %8, %11 : vector<48x384xi1>
    %13 = arith.andi %12, %6 : vector<48x384xi1>
    %14 = vector.broadcast %2 : i32 to vector<48x384xi32>
    %15 = arith.addi %4, %14 : vector<48x384xi32>
    %16 = arith.select %13, %15, %4 : vector<48x384xi1>, vector<48x384xi32>
    %c0 = arith.constant 0 : index
    %c0_3 = arith.constant 0 : index
    %17 = vector.load %arg0[%c0, %c0_3] : memref<48x384xi32, #tpu.memory_space<vmem>>, vector<48x384xi32>
    %18 = arith.cmpi eq, %16, %17 : vector<48x384xi32>
    %19 = arith.extui %18 : vector<48x384xi1> to vector<48x384xi32>
    %20 = arith.sitofp %19 : vector<48x384xi32> to vector<48x384xf32>
    %c0_4 = arith.constant 0 : index
    %c0_5 = arith.constant 0 : index
    %21 = vector.load %arg1[%c0_4, %c0_5] : memref<384x128xf32, #tpu.memory_space<vmem>>, vector<384x128xf32>
    %cst = arith.constant dense<0.000000e+00> : vector<48x128xf32>
    %22 = tpu.matmul %20, %21, %cst {dimension_numbers = #tpu.dot_dimension_numbers<[1], [0], [0], [1], [0, 0, 1, 1], [], []>} : vector<48x384xf32>, vector<384x128xf32>, vector<48x128xf32> -> vector<48x128xf32>
    %c0_6 = arith.constant 0 : index
    %c0_7 = arith.constant 0 : index
    %23 = vector.load %arg2[%c0_6, %c0_7] : memref<8x128xf32, #tpu.memory_space<vmem>>, vector<1x128xf32>
    %24 = vector.broadcast %23 : vector<1x128xf32> to vector<48x128xf32>
    %25 = arith.addf %22, %24 : vector<48x128xf32>
    %cst_8 = arith.constant 0.000000e+00 : f32
    %26 = vector.broadcast %cst_8 : f32 to vector<48x128xf32>
    %27 = arith.maximumf %25, %26 : vector<48x128xf32>
    %28 = vector.shape_cast %27 : vector<48x128xf32> to vector<2x24x128xf32>
    %29 = vector.extract_strided_slice %28 {offsets = [0, 0, 0], sizes = [2, 18, 128], strides = [1, 1, 1]} : vector<2x24x128xf32> to vector<2x18x128xf32>
    %cst_9 = arith.constant dense<0xFF800000> : vector<2x128xf32>
    %30 = vector.multi_reduction <maximumf>, %29, %cst_9 [1] : vector<2x18x128xf32> to vector<2x128xf32>
    %c1 = arith.constant 1 : index
    %c0_10 = arith.constant 0 : index
    %31 = vector.load %arg2[%c1, %c0_10] : memref<8x128xf32, #tpu.memory_space<vmem>>, vector<1x128xf32>
    %c2 = arith.constant 2 : index
    %c0_11 = arith.constant 0 : index
    %32 = vector.load %arg2[%c2, %c0_11] : memref<8x128xf32, #tpu.memory_space<vmem>>, vector<1x1xf32>
    %33 = vector.broadcast %31 : vector<1x128xf32> to vector<2x128xf32>
    %34 = arith.mulf %30, %33 : vector<2x128xf32>
    %cst_12 = arith.constant dense<0.000000e+00> : vector<2xf32>
    %35 = vector.multi_reduction <add>, %34, %cst_12 [1] : vector<2x128xf32> to vector<2xf32>
    %36 = vector.shape_cast %35 : vector<2xf32> to vector<2x1xf32>
    %37 = vector.broadcast %32 : vector<1x1xf32> to vector<2x1xf32>
    %38 = arith.addf %36, %37 : vector<2x1xf32>
    %c0_13 = arith.constant 0 : index
    %c0_14 = arith.constant 0 : index
    %39 = vector.load %arg3[%c0_13, %c0_14] : memref<2x1xf32, #tpu.memory_space<vmem>>, vector<2x1xf32>
    tpu.vector_store %arg3[%c0_13, %c0_14], %38 {strides = array<i32>} : memref<2x1xf32, #tpu.memory_space<vmem>>, vector<2x1xf32>,
    return
  }
}

</mosaic_0001>

<llo_original>
// kernel: tpu_custom_call.1
$region0: #{tpu_custom_call.1}
  #allocation0 [shape = 'u32[]', space=smem, size = 0x4, offset = 0x4, fixed_abs, tag = 'smem constant byte address 0x4 - core index']
  #allocation1 [shape = 'u32[144,128]{1,0:T(1,128)}', space=vmem, size = 0x12000, scoped, tag = 'internal scratch']
  %s0 = inlined_call_operand.hbm [shape: s32[48,384], index: 0, kind: input, shape index: {}]
  %s1 = inlined_call_operand.hbm [shape: f32[384,128], index: 1, kind: input, shape index: {}]
  %s2 = inlined_call_operand.hbm [shape: f32[8,128], index: 2, kind: input, shape index: {}]
  %s3 = inlined_call_operand.vmem [shape: f32[2,1], index: 3, kind: output, shape index: {}]
  %s4 = sld [smem:[#allocation0]]
  $region34: #{tpu_custom_call.1} parent=0
    _
  %s6 = ssub.s32 1, %s4
  %s7 = scalar_select 0, %s6, %s4
  $region1: #{tpu_custom_call.1} parent=0
    #allocation2 [shape = 'u8[73728]{0}', space=vmem, size = 0x12000, scoped, tag = 'input window, operand 0, single buffered']
    #allocation3 [shape = 's32[1]{0}', space=sflag, size = 0x4, scoped, tag = 'scoped memory for tpu_custom_call.1']
    #allocation4 [shape = 'u8[196608]{0}', space=vmem, size = 0x30000, scoped, tag = 'input window, operand 1, single buffered']
    #allocation5 [shape = 's32[1]{0}', space=sflag, size = 0x4, scoped, tag = 'scoped memory for tpu_custom_call.1']
    #allocation6 [shape = 'u8[4096]{0}', space=vmem, size = 0x1000, scoped, tag = 'input window, operand 2, single buffered']
    %8 = vsyncpa [#allocation3], 0
    %9 = vsyncpa [#allocation5], 0
    // Predicated region
    $region2: #{tpu_custom_call.1} parent=1 // pred_check
      _
    $region3: #{tpu_custom_call.1} parent=1 // pred_check_branch
      %11 = sbr.rel (0) target = $region5
    $region4: #{tpu_custom_call.1} parent=1 // pred_region
      %s13 = ssub.s32 2304, 2304
      %14 = vsyncadd [#allocation3], %s13
      %s15 = sshll.u32 [#allocation2], 4
      %s16 = int_to_ptr.vmem [resolvable:$true] %s15
      %21 = dma.hbm_to_vmem [thread:$0]  %s0, 2304, %s16, [#allocation3], 384, 384, 24
    $region5: #{tpu_custom_call.1} parent=1 // pred_fallthru
      _
    // Predicated region
    $region6: #{tpu_custom_call.1} parent=1 // pred_check
      _
    $region7: #{tpu_custom_call.1} parent=1 // pred_check_branch
      %23 = sbr.rel (0) target = $region9
    $region8: #{tpu_custom_call.1} parent=1 // pred_region
      %s25 = ssub.s32 6144, 6144
      %26 = vsyncadd [#allocation5], %s25
      %s27 = sshll.u32 [#allocation4], 4
      %s28 = int_to_ptr.vmem [resolvable:$true] %s27
      %33 = dma.hbm_to_vmem [thread:$0]  %s1, 6144, %s28, [#allocation5], 128, 128, 8
    $region9: #{tpu_custom_call.1} parent=1 // pred_fallthru
      _
    // Predicated region
    $region10: #{tpu_custom_call.1} parent=1 // pred_check
      _
    $region11: #{tpu_custom_call.1} parent=1 // pred_check_branch
      %35 = sbr.rel (0) target = $region13
    $region12: #{tpu_custom_call.1} parent=1 // pred_region
      %s37 = ssub.s32 128, 128
      %38 = vsyncadd [#allocation5], %s37
      %s40 = sshll.u32 [#allocation6], 4
      %s41 = int_to_ptr.vmem [resolvable:$true] %s40
      %43 = dma.hbm_to_vmem [thread:$0]  %s2, 128, %s41, [#allocation5]
    $region13: #{tpu_custom_call.1} parent=1 // pred_fallthru
      _
    // Predicated region
    $region14: #{tpu_custom_call.1} parent=1 // pred_check
      _
    $region15: #{tpu_custom_call.1} parent=1 // pred_check_branch
      %45 = sbr.rel (0) target = $region17
    $region16: #{tpu_custom_call.1} parent=1 // pred_region
      %46 = dma.done [#allocation3], 2304
    $region17: #{tpu_custom_call.1} parent=1 // pred_fallthru
      _
    // Predicated region
    $region18: #{tpu_custom_call.1} parent=1 // pred_check
      _
    $region19: #{tpu_custom_call.1} parent=1 // pred_check_branch
      %48 = sbr.rel (0) target = $region21
    $region20: #{tpu_custom_call.1} parent=1 // pred_region
      %49 = dma.done [#allocation5], 6144
    $region21: #{tpu_custom_call.1} parent=1 // pred_fallthru
      _
    // Predicated region
    $region22: #{tpu_custom_call.1} parent=1 // pred_check
      _
    $region23: #{tpu_custom_call.1} parent=1 // pred_check_branch
      %51 = sbr.rel (0) target = $region25
    $region24: #{tpu_custom_call.1} parent=1 // pred_region
      %52 = dma.done [#allocation5], 128
    $region25: #{tpu_custom_call.1} parent=1 // pred_fallthru
      _
    %v53 = vlaneseq
    %v54 = vand.u32 %v53, 127
    %v55 = vadd.s32 %v54, 128
    %v56 = vadd.s32 %v54, 256
    %vm57 = vcmp.lt.s32.totalorder %v54, 0
    %v58 = vsub.s32 0, %v54
    %v59 = vsel %vm57, %v58, %v54
    %v60 = vshrl.u32 %v59, 7
    %v61 = vand.u32 %v59, 127
    %v62 = vsub.s32 0, %v61
    %v63 = vsel %vm57, %v62, %v61
    %vm64 = vcmp.lt.s32.totalorder %v55, 0
    %v65 = vsub.s32 0, %v55
    %v66 = vsel %vm64, %v65, %v55
    %v67 = vshrl.u32 %v66, 7
    %v68 = vand.u32 %v66, 127
    %v69 = vsub.s32 0, %v68
    %v70 = vsel %vm64, %v69, %v68
    %vm71 = vcmp.lt.s32.totalorder %v56, 0
    %v72 = vsub.s32 0, %v56
    %v73 = vsel %vm71, %v72, %v56
    %v74 = vshrl.u32 %v73, 7
    %v75 = vand.u32 %v73, 127
    %v76 = vsub.s32 0, %v75
    %v77 = vsel %vm71, %v76, %v75
    %vm78 = vcmp.ne.s32.totalorder %v63, 0
    %vm79 = vcmp.ne.s32.totalorder %v70, 0
    %vm80 = vcmp.ne.s32.totalorder %v77, 0
    %vm81 = vcmp.lt.s32.totalorder %v63, 0
    %vm82 = vcmp.lt.s32.totalorder %v70, 0
    %vm83 = vcmp.lt.s32.totalorder %v77, 0
    %vm84 = vmand %vm81, %vm78
    %vm85 = vmand %vm82, %vm79
    %vm86 = vmand %vm83, %vm80
    %v87 = vadd.s32 %v63, 128
    %v88 = vadd.s32 %v70, 128
    %v89 = vadd.s32 %v77, 128
    %v90 = vsel %vm84, %v87, %v63
    %v91 = vsel %vm85, %v88, %v70
    %v92 = vsel %vm86, %v89, %v77
    %v93 = vld [vmem:[#allocation2] sm:$0xff]
    %v94 = vld [vmem:[#allocation2 + $0x8] sm:$0xff]
    %v95 = vld [vmem:[#allocation2 + $0x10] sm:$0xff]
    %v96 = vld [vmem:[#allocation2 + $0x18] sm:$0xff]
    %v97 = vld [vmem:[#allocation2 + $0x20] sm:$0xff]
    %v98 = vld [vmem:[#allocation2 + $0x28] sm:$0xff]
    %v99 = vld [vmem:[#allocation2 + $0x30] sm:$0xff]
    %v100 = vld [vmem:[#allocation2 + $0x38] sm:$0xff]
    %v101 = vld [vmem:[#allocation2 + $0x40] sm:$0xff]
    %v102 = vld [vmem:[#allocation2 + $0x48] sm:$0xff]
    %v103 = vld [vmem:[#allocation2 + $0x50] sm:$0xff]
    %v104 = vld [vmem:[#allocation2 + $0x58] sm:$0xff]
    %v105 = vld [vmem:[#allocation2 + $0x60] sm:$0xff]
    %v106 = vld [vmem:[#allocation2 + $0x68] sm:$0xff]
    %v107 = vld [vmem:[#allocation2 + $0x70] sm:$0xff]
    %v108 = vld [vmem:[#allocation2 + $0x78] sm:$0xff]
    %v109 = vld [vmem:[#allocation2 + $0x80] sm:$0xff]
    %v110 = vld [vmem:[#allocation2 + $0x88] sm:$0xff]
    %vm111 = vcmp.eq.s32.totalorder %v90, %v93
    %vm112 = vcmp.eq.s32.totalorder %v91, %v94
    %vm113 = vcmp.eq.s32.totalorder %v92, %v95
    %vm114 = vcmp.eq.s32.totalorder %v90, %v96
    %vm115 = vcmp.eq.s32.totalorder %v91, %v97
    %vm116 = vcmp.eq.s32.totalorder %v92, %v98
    %vm117 = vcmp.eq.s32.totalorder %v90, %v99
    %vm118 = vcmp.eq.s32.totalorder %v91, %v100
    %vm119 = vcmp.eq.s32.totalorder %v92, %v101
    %vm120 = vcmp.eq.s32.totalorder %v90, %v102
    %vm121 = vcmp.eq.s32.totalorder %v91, %v103
    %vm122 = vcmp.eq.s32.totalorder %v92, %v104
    %vm123 = vcmp.eq.s32.totalorder %v90, %v105
    %vm124 = vcmp.eq.s32.totalorder %v91, %v106
    %vm125 = vcmp.eq.s32.totalorder %v92, %v107
    %vm126 = vcmp.eq.s32.totalorder %v90, %v108
    %vm127 = vcmp.eq.s32.totalorder %v91, %v109
    %vm128 = vcmp.eq.s32.totalorder %v92, %v110
    %v129 = vsel %vm111, 1, 0
    %v130 = vsel %vm112, 1, 0
    %v131 = vsel %vm113, 1, 0
    %v132 = vsel %vm114, 1, 0
    %v133 = vsel %vm115, 1, 0
    %v134 = vsel %vm116, 1, 0
    %v135 = vsel %vm117, 1, 0
    %v136 = vsel %vm118, 1, 0
    %v137 = vsel %vm119, 1, 0
    %v138 = vsel %vm120, 1, 0
    %v139 = vsel %vm121, 1, 0
    %v140 = vsel %vm122, 1, 0
    %v141 = vsel %vm123, 1, 0
    %v142 = vsel %vm124, 1, 0
    %v143 = vsel %vm125, 1, 0
    %v144 = vsel %vm126, 1, 0
    %v145 = vsel %vm127, 1, 0
    %v146 = vsel %vm128, 1, 0
    %v147 = vcvt.s32.f32 %v129
    %v148 = vcvt.s32.f32 %v130
    %v149 = vcvt.s32.f32 %v131
    %v150 = vcvt.s32.f32 %v132
    %v151 = vcvt.s32.f32 %v133
    %v152 = vcvt.s32.f32 %v134
    %v153 = vcvt.s32.f32 %v135
    %v154 = vcvt.s32.f32 %v136
    %v155 = vcvt.s32.f32 %v137
    %v156 = vcvt.s32.f32 %v138
    %v157 = vcvt.s32.f32 %v139
    %v158 = vcvt.s32.f32 %v140
    %v159 = vcvt.s32.f32 %v141
    %v160 = vcvt.s32.f32 %v142
    %v161 = vcvt.s32.f32 %v143
    %v162 = vcvt.s32.f32 %v144
    %v163 = vcvt.s32.f32 %v145
    %v164 = vcvt.s32.f32 %v146
    %v165 = vld [vmem:[#allocation4] sm:$0xff]
    %v166 = vld [vmem:[#allocation4 + $0x8] sm:$0xff]
    %v167 = vld [vmem:[#allocation4 + $0x10] sm:$0xff]
    %v168 = vld [vmem:[#allocation4 + $0x18] sm:$0xff]
    %v169 = vld [vmem:[#allocation4 + $0x20] sm:$0xff]
    %v170 = vld [vmem:[#allocation4 + $0x28] sm:$0xff]
    %v171 = vld [vmem:[#allocation4 + $0x30] sm:$0xff]
    %v172 = vld [vmem:[#allocation4 + $0x38] sm:$0xff]
    %v173 = vld [vmem:[#allocation4 + $0x40] sm:$0xff]
    %v174 = vld [vmem:[#allocation4 + $0x48] sm:$0xff]
    %v175 = vld [vmem:[#allocation4 + $0x50] sm:$0xff]
    %v176 = vld [vmem:[#allocation4 + $0x58] sm:$0xff]
    %v177 = vld [vmem:[#allocation4 + $0x60] sm:$0xff]
    %v178 = vld [vmem:[#allocation4 + $0x68] sm:$0xff]
    %v179 = vld [vmem:[#allocation4 + $0x70] sm:$0xff]
    %v180 = vld [vmem:[#allocation4 + $0x78] sm:$0xff]
    %v181 = vld [vmem:[#allocation4 + $0x80] sm:$0xff]
    %v182 = vld [vmem:[#allocation4 + $0x88] sm:$0xff]
    %v183 = vld [vmem:[#allocation4 + $0x90] sm:$0xff]
    %v184 = vld [vmem:[#allocation4 + $0x98] sm:$0xff]
    %v185 = vld [vmem:[#allocation4 + $0xa0] sm:$0xff]
    %v186 = vld [vmem:[#allocation4 + $0xa8] sm:$0xff]
    %v187 = vld [vmem:[#allocation4 + $0xb0] sm:$0xff]
    %v188 = vld [vmem:[#allocation4 + $0xb8] sm:$0xff]
    %v189 = vld [vmem:[#allocation4 + $0xc0] sm:$0xff]
    %v190 = vld [vmem:[#allocation4 + $0xc8] sm:$0xff]
    %v191 = vld [vmem:[#allocation4 + $0xd0] sm:$0xff]
    %v192 = vld [vmem:[#allocation4 + $0xd8] sm:$0xff]
    %v193 = vld [vmem:[#allocation4 + $0xe0] sm:$0xff]
    %v194 = vld [vmem:[#allocation4 + $0xe8] sm:$0xff]
    %v195 = vld [vmem:[#allocation4 + $0xf0] sm:$0xff]
    %v196 = vld [vmem:[#allocation4 + $0xf8] sm:$0xff]
    %v197 = vld [vmem:[#allocation4 + $0x100] sm:$0xff]
    %v198 = vld [vmem:[#allocation4 + $0x108] sm:$0xff]
    %v199 = vld [vmem:[#allocation4 + $0x110] sm:$0xff]
    %v200 = vld [vmem:[#allocation4 + $0x118] sm:$0xff]
    %v201 = vld [vmem:[#allocation4 + $0x120] sm:$0xff]
    %v202 = vld [vmem:[#allocation4 + $0x128] sm:$0xff]
    %v203 = vld [vmem:[#allocation4 + $0x130] sm:$0xff]
    %v204 = vld [vmem:[#allocation4 + $0x138] sm:$0xff]
    %v205 = vld [vmem:[#allocation4 + $0x140] sm:$0xff]
    %v206 = vld [vmem:[#allocation4 + $0x148] sm:$0xff]
    %v207 = vld [vmem:[#allocation4 + $0x150] sm:$0xff]
    %v208 = vld [vmem:[#allocation4 + $0x158] sm:$0xff]
    %v209 = vld [vmem:[#allocation4 + $0x160] sm:$0xff]
    %v210 = vld [vmem:[#allocation4 + $0x168] sm:$0xff]
    %v211 = vld [vmem:[#allocation4 + $0x170] sm:$0xff]
    %v212 = vld [vmem:[#allocation4 + $0x178] sm:$0xff]
    %v213 = vld [vmem:[#allocation6] sm:$0x1]
    %v214 = vlaneseq
    %v215 = vshrl.u32 %v214, 7
    %v216 = vsub.s32 0, %v215
    %v217 = vrot.slane %v213, %v216
    %218 = vmatprep.subr.mxu0 0.0
    %219 = vmatpush1.msra.mxu0 %v165
    %220 = vmatprep.subr.mxu0 0.0
    %221 = vmatpush1.msra.mxu0 %v166
    %222 = vmatprep.subr.mxu0 0.0
    %223 = vmatpush1.msra.mxu0 %v167
    %224 = vmatprep.subr.mxu0 0.0
    %225 = vmatpush1.msra.mxu0 %v168
    %226 = vmatprep.subr.mxu0 0.0
    %227 = vmatpush1.msra.mxu0 %v169
    %228 = vmatprep.subr.mxu0 0.0
    %229 = vmatpush1.msra.mxu0 %v170
    %230 = vmatprep.subr.mxu0 0.0
    %231 = vmatpush1.msra.mxu0 %v171
    %232 = vmatprep.subr.mxu0 0.0
    %233 = vmatpush1.msra.mxu0 %v172
    %234 = vmatprep.subr.mxu0 0.0
    %235 = vmatpush1.msra.mxu0 %v173
    %236 = vmatprep.subr.mxu0 0.0
    %237 = vmatpush1.msra.mxu0 %v174
    %238 = vmatprep.subr.mxu0 0.0
    %239 = vmatpush1.msra.mxu0 %v175
    %240 = vmatprep.subr.mxu0 0.0
    %241 = vmatpush1.msra.mxu0 %v176
    %242 = vmatprep.subr.mxu0 0.0
    %243 = vmatpush1.msra.mxu0 %v177
    %244 = vmatprep.subr.mxu0 0.0
    %245 = vmatpush1.msra.mxu0 %v178
    %246 = vmatprep.subr.mxu0 0.0
    %247 = vmatpush1.msra.mxu0 %v179
    %248 = vmatprep.subr.mxu0 0.0
    %249 = vmatpush1.msra.mxu0 %v180
    %250 = vmatprep.subr.mxu0 0.0
    %251 = vmatpush1.msra.mxu0 %v181
    %252 = vmatprep.subr.mxu0 0.0
    %253 = vmatpush1.msra.mxu0 %v182
    %254 = vmatprep.subr.mxu0 0.0
    %255 = vmatpush1.msra.mxu0 %v183
    %256 = vmatprep.subr.mxu0 0.0
    %257 = vmatpush1.msra.mxu0 %v184
    %258 = vmatprep.subr.mxu0 0.0
    %259 = vmatpush1.msra.mxu0 %v185
    %260 = vmatprep.subr.mxu0 0.0
    %261 = vmatpush1.msra.mxu0 %v186
    %262 = vmatprep.subr.mxu0 0.0
    %263 = vmatpush1.msra.mxu0 %v187
    %264 = vmatprep.subr.mxu0 0.0
    %265 = vmatpush1.msra.mxu0 %v188
    %266 = vmatprep.subr.mxu0 0.0
    %267 = vmatpush1.msra.mxu0 %v189
    %268 = vmatprep.subr.mxu0 0.0
    %269 = vmatpush1.msra.mxu0 %v190
    %270 = vmatprep.subr.mxu0 0.0
    %271 = vmatpush1.msra.mxu0 %v191
    %272 = vmatprep.subr.mxu0 0.0
    %273 = vmatpush1.msra.mxu0 %v192
    %274 = vmatprep.subr.mxu0 0.0
    %275 = vmatpush1.msra.mxu0 %v193
    %276 = vmatprep.subr.mxu0 0.0
    %277 = vmatpush1.msra.mxu0 %v194
    %278 = vmatprep.subr.mxu0 0.0
    %279 = vmatpush1.msra.mxu0 %v195
    %280 = vmatprep.subr.mxu0 0.0
    %281 = vmatpush1.msra.mxu0 %v196
    %282 = vmatprep.mubr.f32.mxu0 %v148
    %283 = vmatmul.mubr.f32.gmra.mrb[0].mxu0 %v147
    %v284 = vpop.f32.mrb[0].mxu0
    %v285 = vadd.f32 %v217, %v284
    %v286 = vpop.f32.mrb[0].mxu0
    %287 = vmatprep.mubr.f32.mxu0 %v151
    %288 = vmatmul.mubr.f32.gmra.mrb[0].mxu0 %v150
    %v289 = vpop.f32.mrb[0].mxu0
    %v290 = vadd.f32 %v217, %v289
    %v291 = vpop.f32.mrb[0].mxu0
    %292 = vmatprep.mubr.f32.mxu0 %v154
    %293 = vmatmul.mubr.f32.gmra.mrb[0].mxu0 %v153
    %v294 = vpop.f32.mrb[0].mxu0
    %v295 = vadd.f32 %v217, %v294
    %v296 = vpop.f32.mrb[0].mxu0
    %297 = vmatprep.mubr.f32.mxu0 %v157
    %298 = vmatmul.mubr.f32.gmra.mrb[0].mxu0 %v156
    %v299 = vpop.f32.mrb[0].mxu0
    %v300 = vadd.f32 %v217, %v299
    %v301 = vpop.f32.mrb[0].mxu0
    %302 = vmatprep.mubr.f32.mxu0 %v160
    %303 = vmatmul.mubr.f32.gmra.mrb[0].mxu0 %v159
    %v304 = vpop.f32.mrb[0].mxu0
    %v305 = vadd.f32 %v217, %v304
    %v306 = vpop.f32.mrb[0].mxu0
    %307 = vmatprep.mubr.f32.mxu0 %v163
    %308 = vmatmul.mubr.f32.gmra.mrb[0].mxu0 %v162
    %v309 = vpop.f32.mrb[0].mxu0
    %v310 = vadd.f32 %v217, %v309
    %v311 = vpop.f32.mrb[0].mxu0
    %312 = vdwg.mxu0
    %313 = vmatprep.subr.mxu0 0.0
    %314 = vmatpush1.msra.mxu0 %v197
    %315 = vmatprep.subr.mxu0 0.0
    %316 = vmatpush1.msra.mxu0 %v198
    %317 = vmatprep.subr.mxu0 0.0
    %318 = vmatpush1.msra.mxu0 %v199
    %319 = vmatprep.subr.mxu0 0.0
    %320 = vmatpush1.msra.mxu0 %v200
    %321 = vmatprep.subr.mxu0 0.0
    %322 = vmatpush1.msra.mxu0 %v201
    %323 = vmatprep.subr.mxu0 0.0
    %324 = vmatpush1.msra.mxu0 %v202
    %325 = vmatprep.subr.mxu0 0.0
    %326 = vmatpush1.msra.mxu0 %v203
    %327 = vmatprep.subr.mxu0 0.0
    %328 = vmatpush1.msra.mxu0 %v204
    %329 = vmatprep.subr.mxu0 0.0
    %330 = vmatpush1.msra.mxu0 %v205
    %331 = vmatprep.subr.mxu0 0.0
    %332 = vmatpush1.msra.mxu0 %v206
    %333 = vmatprep.subr.mxu0 0.0
    %334 = vmatpush1.msra.mxu0 %v207
    %335 = vmatprep.subr.mxu0 0.0
    %336 = vmatpush1.msra.mxu0 %v208
    %337 = vmatprep.subr.mxu0 0.0
    %338 = vmatpush1.msra.mxu0 %v209
    %339 = vmatprep.subr.mxu0 0.0
    %340 = vmatpush1.msra.mxu0 %v210
    %341 = vmatprep.subr.mxu0 0.0
    %342 = vmatpush1.msra.mxu0 %v211
    %343 = vmatprep.subr.mxu0 0.0
    %344 = vmatpush1.msra.mxu0 %v212
    %345 = vmatprep.subr.mxu0 0.0
    %346 = vmatpush1.msra.mxu0 0.0
    %347 = vmatprep.subr.mxu0 0.0
    %348 = vmatpush1.msra.mxu0 0.0
    %349 = vmatprep.subr.mxu0 0.0
    %350 = vmatpush1.msra.mxu0 0.0
    %351 = vmatprep.subr.mxu0 0.0
    %352 = vmatpush1.msra.mxu0 0.0
    %353 = vmatprep.subr.mxu0 0.0
    %354 = vmatpush1.msra.mxu0 0.0
    %355 = vmatprep.subr.mxu0 0.0
    %356 = vmatpush1.msra.mxu0 0.0
    %357 = vmatprep.subr.mxu0 0.0
    %358 = vmatpush1.msra.mxu0 0.0
    %359 = vmatprep.subr.mxu0 0.0
    %360 = vmatpush1.msra.mxu0 0.0
    %361 = vmatprep.subr.mxu0 0.0
    %362 = vmatpush1.msra.mxu0 0.0
    %363 = vmatprep.subr.mxu0 0.0
    %364 = vmatpush1.msra.mxu0 0.0
    %365 = vmatprep.subr.mxu0 0.0
    %366 = vmatpush1.msra.mxu0 0.0
    %367 = vmatprep.subr.mxu0 0.0
    %368 = vmatpush1.msra.mxu0 0.0
    %369 = vmatprep.subr.mxu0 0.0
    %370 = vmatpush1.msra.mxu0 0.0
    %371 = vmatprep.subr.mxu0 0.0
    %372 = vmatpush1.msra.mxu0 0.0
    %373 = vmatprep.subr.mxu0 0.0
    %374 = vmatpush1.msra.mxu0 0.0
    %375 = vmatprep.subr.mxu0 0.0
    %376 = vmatpush1.msra.mxu0 0.0
    %377 = vmatprep.mubr.f32.mxu0 0.0
    %378 = vmatmul.mubr.f32.gmra.mrb[0].mxu0 %v149
    %v379 = vpop.f32.mrb[0].mxu0
    %v380 = vadd.f32 %v285, %v379
    %v381 = vpop.f32.mrb[0].mxu0
    %382 = vmatprep.mubr.f32.mxu0 0.0
    %383 = vmatmul.mubr.f32.gmra.mrb[0].mxu0 %v152
    %v384 = vpop.f32.mrb[0].mxu0
    %v385 = vadd.f32 %v290, %v384
    %v386 = vpop.f32.mrb[0].mxu0
    %387 = vmatprep.mubr.f32.mxu0 0.0
    %388 = vmatmul.mubr.f32.gmra.mrb[0].mxu0 %v155
    %v389 = vpop.f32.mrb[0].mxu0
    %v390 = vadd.f32 %v295, %v389
    %v391 = vpop.f32.mrb[0].mxu0
    %392 = vmatprep.mubr.f32.mxu0 0.0
    %393 = vmatmul.mubr.f32.gmra.mrb[0].mxu0 %v158
    %v394 = vpop.f32.mrb[0].mxu0
    %v395 = vadd.f32 %v300, %v394
    %v396 = vpop.f32.mrb[0].mxu0
    %397 = vmatprep.mubr.f32.mxu0 0.0
    %398 = vmatmul.mubr.f32.gmra.mrb[0].mxu0 %v161
    %v399 = vpop.f32.mrb[0].mxu0
    %v400 = vadd.f32 %v305, %v399
    %v401 = vpop.f32.mrb[0].mxu0
    %402 = vmatprep.mubr.f32.mxu0 0.0
    %403 = vmatmul.mubr.f32.gmra.mrb[0].mxu0 %v164
    %v404 = vpop.f32.mrb[0].mxu0
    %v405 = vadd.f32 %v310, %v404
    %v406 = vpop.f32.mrb[0].mxu0
    %407 = vdwg.mxu0
    %v408 = vmax.f32 %v380, 0.0
    %v409 = vmax.f32 %v385, 0.0
    %v410 = vmax.f32 %v390, 0.0
    %v411 = vmax.f32 %v395, 0.0
    %v412 = vmax.f32 %v400, 0.0
    %v413 = vmax.f32 %v405, 0.0
    %vm414 = vcmask 1041408
    %v415 = vsel %vm414, %v410, -inf
    %v416 = vmax.f32 %v408, %v415
    %v417 = vmax.f32 %v416, %v409
    %v418 = vrot.slane %v417, 4
    %v419 = vmax.f32 %v417, %v418
    %v420 = vrot.slane %v419, 2
    %v421 = vmax.f32 %v419, %v420
    %v422 = vrot.slane %v421, 1
    %v423 = vmax.f32 %v421, %v422
    %v424 = vsel %vm414, %v413, -inf
    %v425 = vmax.f32 %v411, %v424
    %v426 = vmax.f32 %v425, %v412
    %v427 = vrot.slane %v426, 4
    %v428 = vmax.f32 %v426, %v427
    %v429 = vrot.slane %v428, 2
    %v430 = vmax.f32 %v428, %v429
    %v431 = vrot.slane %v430, 1
    %v432 = vmax.f32 %v430, %v431
    %v433 = vld [vmem:[#allocation6 + $0x1] sm:$0x1]
    %v434 = vld [vmem:[#allocation6 + $0x2] sm:$0x1]
    %v435 = vlaneseq
    %v436 = vshrl.u32 %v435, 7
    %v437 = vsub.s32 0, %v436
    %v438 = vrot.slane %v433, %v437
    %v439 = vmul.f32 %v423, %v438
    %v440 = vmul.f32 %v432, %v438
    %v443 = vrot.slane %v440, 7
    %vm444 = vcmask 1041409
    %v445 = vsel %vm444, %v443, %v439
    %v447 = vsel %vm414, %v445, 0.0
    %448 = vadd.xlane.f32.xlu0 %v447
    %v449 = vpop.xlane.xlu0 %448
    %v450 = vlaneseq
    %v451 = vshrl.u32 %v450, 7
    %v452 = vsub.s32 0, %v451
    %v453 = vrot.slane %v434, %v452
    %v454 = vadd.f32 %v449, %v453
    %vm455 = vcmask 1024
    %456 = vst.msk [vmem:[%s3] sm:$0x3] %vm455, %v454
    // Predicated region
    $region26: #{tpu_custom_call.1} parent=1 // pred_check
      _
    $region27: #{tpu_custom_call.1} parent=1 // pred_check_branch
      %458 = sbr.rel (0) target = $region29
    $region28: #{tpu_custom_call.1} parent=1 // pred_region
      _
    $region29: #{tpu_custom_call.1} parent=1 // pred_fallthru
      _
    // Predicated region
    $region30: #{tpu_custom_call.1} parent=1 // pred_check
      _
    $region31: #{tpu_custom_call.1} parent=1 // pred_check_branch
      %460 = sbr.rel (0) target = $region33
    $region32: #{tpu_custom_call.1} parent=1 // pred_region
      _
    $region33: #{tpu_custom_call.1} parent=1 // pred_fallthru
      _
    %461 = vsyncpa [#allocation3], 1
    %462 = vsyncpa [#allocation5], 1

</llo_original>
